<compile_context>
chip_gen: v6e
topology: v6e:2x2x1
jax: 0.10.0
libtpu: 0.0.40
codegen_flags: <defaults>
</compile_context>

<pallas_src>
from typing import NamedTuple, Optional

import jax
import jax.numpy as jnp
from jax.experimental import pallas as pl
from jax.experimental.pallas import tpu as pltpu


def _round_up(a: int, b: int) -> int:
    return (a + b - 1) // b * b


def _vmem_capacity_bytes() -> int:
    try:
        return int(pltpu.get_tpu_info().vmem_capacity_bytes)
    except Exception:
        return 64 << 20  # conservative fallback (v7x per-TensorCore VMEM)


class PreparedMLPWeights(NamedTuple):
    w_gate: jax.Array   # [H, Ip]   (in_features, out_features layout)
    w_up:   jax.Array   # [H, Ip]
    w_down: jax.Array   # [Ip, H]
    tile_n: int         # Ip % tile_n == 0, tile_n multiple of 128


def prepare_mlp_weights(w_gate_up: jax.Array, w_down: jax.Array, *,
                        tile_n: Optional[int] = None,
                        dtype=None) -> PreparedMLPWeights:
    """Split / zero-pad / cast the Molmo MLP weights.

    Call ONCE at weight-load time (not per forward call): the column slices and pads
    materialize full HBM copies of every weight.  `dtype=jnp.bfloat16` is recommended —
    it halves the binding HBM weight traffic and runs the MXU at full bf16 rate
    (the kernel keeps an f32 accumulator and f32 silu regardless).
    """
    H, I2 = w_gate_up.shape
    I = I2 // 2
    assert w_gate_up.shape == (H, 2 * I)
    assert w_down.shape == (I, H)

    if dtype is None:
        dtype = w_gate_up.dtype
    wbytes = jnp.dtype(dtype).itemsize

    if tile_n is None:
        big_vmem = _vmem_capacity_bytes() >= (96 << 20)   # v5e/v6e: 128 MiB, v7x: 64 MiB
        tile_n = 1024 if big_vmem else (512 if wbytes <= 2 else 256)
    tn = _round_up(min(tile_n, _round_up(I, 128)), 128)
    Ip = _round_up(I, tn)

    w_gate = w_gate_up[:, :I]
    w_up = w_gate_up[:, I:]
    if Ip != I:
        # Padded gate columns compute gate == 0 -> h == 0, and the matching w_down rows
        # are zero, so padding contributes nothing to the output.
        w_gate = jnp.pad(w_gate, ((0, 0), (0, Ip - I)))
        w_up = jnp.pad(w_up, ((0, 0), (0, Ip - I)))
        w_down = jnp.pad(w_down, ((0, Ip - I), (0, 0)))

    return PreparedMLPWeights(w_gate.astype(dtype), w_up.astype(dtype),
                              w_down.astype(dtype), tn)


def _mlp_kernel(x_ref, w_gate_ref, w_up_ref, w_down_ref, o_ref, acc_ref):
    """One (seq-tile i, intermediate-tile j) step of the fused MLP."""
    j = pl.program_id(1)

    @pl.when(j == 0)
    def _():
        acc_ref[...] = jnp.zeros_like(acc_ref)

    x = x_ref[...]                                                    # [tm, H]
    gate = jnp.dot(x, w_gate_ref[...],
                   preferred_element_type=jnp.float32)                # [tm, tn] f32
    up = jnp.dot(x, w_up_ref[...],
                 preferred_element_type=jnp.float32)                  # [tm, tn] f32

    # MulAndSilu: first half * silu(second half); kept in f32 (sigmoid -> EUP slot).
    h = gate * (up * jax.nn.sigmoid(up))                              # [tm, tn] f32

    acc_ref[...] += jnp.dot(h.astype(w_down_ref.dtype), w_down_ref[...],
                            preferred_element_type=jnp.float32)       # [tm, H] f32

    @pl.when(j == pl.num_programs(1) - 1)
    def _():
        o_ref[...] = acc_ref[...].astype(o_ref.dtype)


def language_model_mlp_prepared(x: jax.Array, weights: PreparedMLPWeights, *,
                                tile_m: Optional[int] = None,
                                vmem_limit_bytes: Optional[int] = None) -> jax.Array:
    """Hot-path forward: x [T, H] -> [T, H] using prepared (split/padded/cast) weights."""
    T, H = x.shape
    w_gate, w_up, w_down, tn = weights
    Ip = w_gate.shape[1]
    assert w_gate.shape == (H, Ip) and w_up.shape == (H, Ip) and w_down.shape == (Ip, H)
    assert Ip % tn == 0

    xbytes = jnp.dtype(x.dtype).itemsize
    wbytes = jnp.dtype(w_gate.dtype).itemsize
    obytes = xbytes

    cap = _vmem_capacity_bytes()
    budget = max(cap - (8 << 20), 32 << 20)   # leave ~8 MiB headroom below capacity

    # tile_m is the main perf lever; keep it >= 256 on every generation.
    if tile_m is None:
        tile_m = 512
    tm = min(tile_m, _round_up(T, 8))

    # Keep >= 2 seq tiles when there is enough work so both v7x TensorCores are busy.
    if _round_up(T, tm) // tm < 2 and T >= 512:
        tm = _round_up(-(-T // 2), 8)

    def vmem_need(tm_, tn_):
        return (2 * 3 * H * tn_ * wbytes     # double-buffered gate/up/down weight slabs
                + 2 * tm_ * H * xbytes       # double-buffered x tile
                + 2 * tm_ * H * obytes       # double-buffered out tile
                + tm_ * H * 4)               # f32 accumulator scratch

    # Auto-shrink (tn first, then tm) until the working set fits the per-core VMEM.
    while vmem_need(tm, tn) > budget and tn >= 512 and Ip % (tn // 2) == 0:
        tn //= 2
    while vmem_need(tm, tn) > budget and tm > 256:
        tm = max(256, _round_up(tm // 2, 8))

    Tp = _round_up(T, tm)
    if Tp != T:
        x = jnp.pad(x, ((0, Tp - T), (0, 0)))   # activations only; weights untouched here

    grid = (Tp // tm, Ip // tn)

    if vmem_limit_bytes is None:
        vmem_limit_bytes = min(budget,
                               max(int(vmem_need(tm, tn) * 1.3) + (4 << 20), 32 << 20))

    # Weight slabs are re-streamed once per seq tile (grid[0] times); x / out move once.
    cost = pl.CostEstimate(
        flops=6 * Tp * H * Ip,
        transcendentals=Tp * Ip,
        bytes_accessed=(Tp * H * xbytes
                        + grid[0] * (w_gate.size + w_up.size + w_down.size) * wbytes
                        + Tp * H * obytes),
    )

    out = pl.pallas_call(
        _mlp_kernel,
        out_shape=jax.ShapeDtypeStruct((Tp, H), x.dtype),
        grid_spec=pltpu.PrefetchScalarGridSpec(
            num_scalar_prefetch=0,
            grid=grid,
            in_specs=[
                pl.BlockSpec((tm, H), lambda i, j: (i, 0)),   # x seq tile (resident over j)
                pl.BlockSpec((H, tn), lambda i, j: (0, j)),   # gate weight slab
                pl.BlockSpec((H, tn), lambda i, j: (0, j)),   # up weight slab
                pl.BlockSpec((tn, H), lambda i, j: (j, 0)),   # down weight slab
            ],
            out_specs=pl.BlockSpec((tm, H), lambda i, j: (i, 0)),
            scratch_shapes=[pltpu.VMEM((tm, H), jnp.float32)],
        ),
        compiler_params=pltpu.CompilerParams(
            dimension_semantics=("parallel", "arbitrary"),
            vmem_limit_bytes=int(vmem_limit_bytes),
        ),
        cost_estimate=cost,
    )(x, w_gate, w_up, w_down)

    return out[:T] if Tp != T else out


def language_model_mlp(x, w_gate_up, w_down, *, tile_m=None, tile_n=None,
                       weight_dtype=None, vmem_limit_bytes=None):
    """Convenience one-shot wrapper (prepare + run).  Production code should call
    prepare_mlp_weights() once at weight-load time and reuse the result per step."""
    weights = prepare_mlp_weights(w_gate_up, w_down, tile_n=tile_n, dtype=weight_dtype)
    return language_model_mlp_prepared(x, weights, tile_m=tile_m,
                                       vmem_limit_bytes=vmem_limit_bytes)


def reference_mlp(x, w_gate_up, w_down):
    gate_up = x @ w_gate_up
    I = w_down.shape[0]
    return (gate_up[:, :I] * jax.nn.silu(gate_up[:, I:])) @ w_down


if __name__ == "__main__":
    # Small shapes consistent with the module:
    #   hidden_size = 32, config.intermediate_size = 128 -> I = intermediate_size // 2 = 64.
    T, H, I = 8, 32, 64

    key = jax.random.PRNGKey(0)
    kx, kg, kd = jax.random.split(key, 3)

    x = jax.random.normal(kx, (T, H), dtype=jnp.float32)
    # Weights stored as [in_features, out_features] (i.e. W^T of the PyTorch layout).
    w_gate_up = jax.random.normal(kg, (H, 2 * I), dtype=jnp.float32) * 0.05
    w_down = jax.random.normal(kd, (I, H), dtype=jnp.float32) * 0.05

    ref = reference_mlp(x, w_gate_up, w_down)

    # f32 path (tight check).
    weights_f32 = prepare_mlp_weights(w_gate_up, w_down)
    out = jax.block_until_ready(language_model_mlp_prepared(x, weights_f32))
    assert out.shape == (T, H)
    assert jnp.allclose(out, ref, atol=1e-5, rtol=1e-5), "f32 mismatch vs reference"

    # bf16 weight/activation path (recommended production config; loose check since the
    # inputs/weights are rounded to bf16; f32 accumulator + f32 silu kept in-kernel).
    weights_bf16 = prepare_mlp_weights(w_gate_up, w_down, dtype=jnp.bfloat16)
    out_bf16 = jax.block_until_ready(
        language_model_mlp_prepared(x.astype(jnp.bfloat16), weights_bf16))
    assert jnp.allclose(out_bf16.astype(jnp.float32), ref, atol=5e-2, rtol=5e-2), \
        "bf16 mismatch vs reference"

    print("KERNEL_OK")
</pallas_src>

<mosaic_0001>
module attributes {stable_mosaic.version = 11 : i64} {
  func.func @_mlp_kernel(%arg0: i32, %arg1: i32, %arg2: memref<8x32xf32, #tpu.memory_space<vmem>>, %arg3: memref<32x128xf32, #tpu.memory_space<vmem>>, %arg4: memref<32x128xf32, #tpu.memory_space<vmem>>, %arg5: memref<128x32xf32, #tpu.memory_space<vmem>>, %arg6: memref<8x32xf32, #tpu.memory_space<vmem>>, %arg7: memref<8x32xf32, #tpu.memory_space<vmem>>) attributes {dimension_semantics = [#tpu.dimension_semantics<parallel>, #tpu.dimension_semantics<arbitrary>], iteration_bounds = array<i64: 1, 1>, scalar_prefetch = 0 : i64, scratch_operands = 1 : i64, tpu.core_type = #tpu.core_type<tc>, window_params = [{transform_indices = @transform_0, window_bounds = array<i64: 8, 32>}, {transform_indices = @transform_1, window_bounds = array<i64: 32, 128>}, {transform_indices = @transform_2, window_bounds = array<i64: 32, 128>}, {transform_indices = @transform_3, window_bounds = array<i64: 128, 32>}, {transform_indices = @transform_4, window_bounds = array<i64: 8, 32>}]} {
    %c0_i32 = arith.constant 0 : i32
    %0 = arith.cmpi eq, %arg1, %c0_i32 : i32
    %1 = arith.extui %0 : i1 to i32
    %c0_i32_0 = arith.constant 0 : i32
    %2 = arith.cmpi ne, %1, %c0_i32_0 : i32
    scf.if %2 {
      %cst_17 = arith.constant 0.000000e+00 : f32
      %23 = vector.broadcast %cst_17 : f32 to vector<8x32xf32>
      %c0_18 = arith.constant 0 : index
      %c0_19 = arith.constant 0 : index
      %24 = vector.load %arg7[%c0_18, %c0_19] : memref<8x32xf32, #tpu.memory_space<vmem>>, vector<8x32xf32>
      tpu.vector_store %arg7[%c0_18, %c0_19], %23 {strides = array<i32>} : memref<8x32xf32, #tpu.memory_space<vmem>>, vector<8x32xf32>,
    } else {
    }
    %c0 = arith.constant 0 : index
    %c0_1 = arith.constant 0 : index
    %3 = vector.load %arg2[%c0, %c0_1] : memref<8x32xf32, #tpu.memory_space<vmem>>, vector<8x32xf32>
    %c0_2 = arith.constant 0 : index
    %c0_3 = arith.constant 0 : index
    %4 = vector.load %arg3[%c0_2, %c0_3] : memref<32x128xf32, #tpu.memory_space<vmem>>, vector<32x128xf32>
    %cst = arith.constant dense<0.000000e+00> : vector<8x128xf32>
    %5 = tpu.matmul %3, %4, %cst {dimension_numbers = #tpu.dot_dimension_numbers<[1], [0], [0], [1], [0, 0, 1, 1], [], []>} : vector<8x32xf32>, vector<32x128xf32>, vector<8x128xf32> -> vector<8x128xf32>
    %c0_4 = arith.constant 0 : index
    %c0_5 = arith.constant 0 : index
    %6 = vector.load %arg4[%c0_4, %c0_5] : memref<32x128xf32, #tpu.memory_space<vmem>>, vector<32x128xf32>
    %cst_6 = arith.constant dense<0.000000e+00> : vector<8x128xf32>
    %7 = tpu.matmul %3, %6, %cst_6 {dimension_numbers = #tpu.dot_dimension_numbers<[1], [0], [0], [1], [0, 0, 1, 1], [], []>} : vector<8x32xf32>, vector<32x128xf32>, vector<8x128xf32> -> vector<8x128xf32>
    %8 = arith.negf %7 : vector<8x128xf32>
    %9 = math.exp %8 : vector<8x128xf32>
    %cst_7 = arith.constant 1.000000e+00 : f32
    %10 = vector.broadcast %cst_7 : f32 to vector<8x128xf32>
    %11 = arith.addf %10, %9 : vector<8x128xf32>
    %12 = arith.divf %10, %11 : vector<8x128xf32>
    %13 = arith.mulf %7, %12 : vector<8x128xf32>
    %14 = arith.mulf %5, %13 : vector<8x128xf32>
    %c0_8 = arith.constant 0 : index
    %c0_9 = arith.constant 0 : index
    %15 = vector.load %arg7[%c0_8, %c0_9] : memref<8x32xf32, #tpu.memory_space<vmem>>, vector<8x32xf32>
    %c0_10 = arith.constant 0 : index
    %c0_11 = arith.constant 0 : index
    %16 = vector.load %arg5[%c0_10, %c0_11] : memref<128x32xf32, #tpu.memory_space<vmem>>, vector<128x32xf32>
    %cst_12 = arith.constant dense<0.000000e+00> : vector<8x32xf32>
    %17 = tpu.matmul %14, %16, %cst_12 {dimension_numbers = #tpu.dot_dimension_numbers<[1], [0], [0], [1], [0, 0, 1, 1], [], []>} : vector<8x128xf32>, vector<128x32xf32>, vector<8x32xf32> -> vector<8x32xf32>
    %18 = arith.addf %15, %17 : vector<8x32xf32>
    %c0_13 = arith.constant 0 : index
    %c0_14 = arith.constant 0 : index
    %19 = vector.load %arg7[%c0_13, %c0_14] : memref<8x32xf32, #tpu.memory_space<vmem>>, vector<8x32xf32>
    tpu.vector_store %arg7[%c0_13, %c0_14], %18 {strides = array<i32>} : memref<8x32xf32, #tpu.memory_space<vmem>>, vector<8x32xf32>,
    %c0_i32_15 = arith.constant 0 : i32
    %20 = arith.cmpi eq, %arg1, %c0_i32_15 : i32
    %21 = arith.extui %20 : i1 to i32
    %c0_i32_16 = arith.constant 0 : i32
    %22 = arith.cmpi ne, %21, %c0_i32_16 : i32
    scf.if %22 {
      %c0_17 = arith.constant 0 : index
      %c0_18 = arith.constant 0 : index
      %23 = vector.load %arg7[%c0_17, %c0_18] : memref<8x32xf32, #tpu.memory_space<vmem>>, vector<8x32xf32>
      %c0_19 = arith.constant 0 : index
      %c0_20 = arith.constant 0 : index
      %24 = vector.load %arg6[%c0_19, %c0_20] : memref<8x32xf32, #tpu.memory_space<vmem>>, vector<8x32xf32>
      tpu.vector_store %arg6[%c0_19, %c0_20], %23 {strides = array<i32>} : memref<8x32xf32, #tpu.memory_space<vmem>>, vector<8x32xf32>,
    } else {
    }
    return
  }
  func.func @transform_0(%arg0: i32, %arg1: i32) -> (i32, i32) {
    %c0_i32 = arith.constant 0 : i32
    %c0_i32_0 = arith.constant 0 : i32
    return %arg0, %c0_i32 : i32, i32
  }
  func.func @transform_1(%arg0: i32, %arg1: i32) -> (i32, i32) {
    %c0_i32 = arith.constant 0 : i32
    %c0_i32_0 = arith.constant 0 : i32
    return %c0_i32, %arg1 : i32, i32
  }
  func.func @transform_2(%arg0: i32, %arg1: i32) -> (i32, i32) {
    %c0_i32 = arith.constant 0 : i32
    %c0_i32_0 = arith.constant 0 : i32
    return %c0_i32, %arg1 : i32, i32
  }
  func.func @transform_3(%arg0: i32, %arg1: i32) -> (i32, i32) {
    %c0_i32 = arith.constant 0 : i32
    %c0_i32_0 = arith.constant 0 : i32
    return %arg1, %c0_i32 : i32, i32
  }
  func.func @transform_4(%arg0: i32, %arg1: i32) -> (i32, i32) {
    %c0_i32 = arith.constant 0 : i32
    %c0_i32_0 = arith.constant 0 : i32
    return %arg0, %c0_i32 : i32, i32
  }
}

</mosaic_0001>

<llo_original>
// kernel: tpu_custom_call.1
$region0: #{tpu_custom_call.1}
  #allocation0 [shape = 'u32[]', space=smem, size = 0x4, offset = 0x4, fixed_abs, tag = 'smem constant byte address 0x4 - core index']
  #allocation1 [shape = 'u32[144,128]{1,0:T(1,128)}', space=vmem, size = 0x12000, scoped, tag = 'internal scratch']
  #allocation2 [shape = 'f32[8,32]{1,0:T(8,128)}', space=vmem, size = 0x1000, scoped, tag = 'scratch operand']
  %s0 = inlined_call_operand.vmem [shape: f32[8,32], index: 0, kind: input, shape index: {}]
  %s1 = inlined_call_operand.vmem [shape: f32[32,128], index: 1, kind: input, shape index: {}]
  %s2 = inlined_call_operand.vmem [shape: f32[32,128], index: 2, kind: input, shape index: {}]
  %s3 = inlined_call_operand.vmem [shape: f32[128,32], index: 3, kind: input, shape index: {}]
  %s4 = inlined_call_operand.hbm [shape: f32[8,32], index: 4, kind: output, shape index: {}]
  %s5 = sld [smem:[#allocation0]]
  $region34: #{tpu_custom_call.1} parent=0
    _
  %s7 = ssub.s32 1, %s5
  %s8 = scalar_select 0, %s7, %s5
  $region1: #{tpu_custom_call.1} parent=0
    #allocation3 [shape = 'u8[4096]{0}', space=vmem, size = 0x1000, scoped, tag = 'output window, operand 0, single buffered']
    #allocation4 [shape = 's32[1]{0}', space=sflag, size = 0x4, scoped, tag = 'scoped memory for tpu_custom_call.1']
    %9 = vsyncpa [#allocation4], 0
    // Predicated region
    $region2: #{tpu_custom_call.1} parent=1 // pred_check
      _
    $region3: #{tpu_custom_call.1} parent=1 // pred_check_branch
      %11 = sbr.rel (0) target = $region5
    $region4: #{tpu_custom_call.1} parent=1 // pred_region
      _
    $region5: #{tpu_custom_call.1} parent=1 // pred_fallthru
      _
    // Predicated region
    $region6: #{tpu_custom_call.1} parent=1 // pred_check
      _
    $region7: #{tpu_custom_call.1} parent=1 // pred_check_branch
      %13 = sbr.rel (0) target = $region9
    $region8: #{tpu_custom_call.1} parent=1 // pred_region
      _
    $region9: #{tpu_custom_call.1} parent=1 // pred_fallthru
      _
    // Predicated region
    $region10: #{tpu_custom_call.1} parent=1 // pred_check
      _
    $region11: #{tpu_custom_call.1} parent=1 // pred_check_branch
      %15 = sbr.rel (0) target = $region13
    $region12: #{tpu_custom_call.1} parent=1 // pred_region
      _
    $region13: #{tpu_custom_call.1} parent=1 // pred_fallthru
      _
    // Predicated region
    $region14: #{tpu_custom_call.1} parent=1 // pred_check
      _
    $region15: #{tpu_custom_call.1} parent=1 // pred_check_branch
      %17 = sbr.rel (0) target = $region17
    $region16: #{tpu_custom_call.1} parent=1 // pred_region
      _
    $region17: #{tpu_custom_call.1} parent=1 // pred_fallthru
      _
    %p18 = scmp.eq.s32.totalorder 0, 0
    // Predicated region
    $region18: #{tpu_custom_call.1} parent=1 // pred_check
      %p19 = pneg %p18
    $region19: #{tpu_custom_call.1} parent=1 // pred_check_branch
      %21 = sbr.rel (%p19) target = $region21
    $region20: #{tpu_custom_call.1} parent=1 // pred_region
      %vm22 = vcmask 261120
      %23 = vst.msk [vmem:[#allocation2] sm:$0xff] %vm22, 0.0
    $region21: #{tpu_custom_call.1} parent=1 // pred_fallthru
      _
    %v24 = vld [vmem:[%s0] sm:$0xff]
    %v25 = vld [vmem:[%s1] sm:$0xff]
    %v26 = vld [vmem:[%s1 + $0x8] sm:$0xff]
    %v27 = vld [vmem:[%s1 + $0x10] sm:$0xff]
    %v28 = vld [vmem:[%s1 + $0x18] sm:$0xff]
    %vm29 = vcmask 261120
    %v31 = vsel %vm29, %v24, 0
    %33 = vmatprep.subr.mxu0 0.0
    %34 = vmatpush1.msra.mxu0 0.0
    %35 = vmatprep.subr.mxu0 0.0
    %36 = vmatpush1.msra.mxu0 0.0
    %37 = vmatprep.subr.mxu0 0.0
    %38 = vmatpush1.msra.mxu0 0.0
    %39 = vmatprep.subr.mxu0 0.0
    %40 = vmatpush1.msra.mxu0 0.0
    %41 = vmatprep.subr.mxu0 0.0
    %42 = vmatpush1.msra.mxu0 0.0
    %43 = vmatprep.subr.mxu0 0.0
    %44 = vmatpush1.msra.mxu0 0.0
    %45 = vmatprep.subr.mxu0 0.0
    %46 = vmatpush1.msra.mxu0 0.0
    %47 = vmatprep.subr.mxu0 0.0
    %48 = vmatpush1.msra.mxu0 0.0
    %49 = vmatprep.subr.mxu0 0.0
    %50 = vmatpush1.msra.mxu0 0.0
    %51 = vmatprep.subr.mxu0 0.0
    %52 = vmatpush1.msra.mxu0 0.0
    %53 = vmatprep.subr.mxu0 0.0
    %54 = vmatpush1.msra.mxu0 0.0
    %55 = vmatprep.subr.mxu0 0.0
    %56 = vmatpush1.msra.mxu0 0.0
    %57 = vmatprep.subr.mxu0 0.0
    %58 = vmatpush1.msra.mxu0 %v28
    %59 = vmatprep.subr.mxu0 0.0
    %60 = vmatpush1.msra.mxu0 %v27
    %61 = vmatprep.subr.mxu0 0.0
    %62 = vmatpush1.msra.mxu0 %v26
    %63 = vmatprep.subr.mxu0 0.0
    %64 = vmatpush1.msra.mxu0 %v25
    %65 = vmatprep.subr.mxu0 0.0
    %66 = vmatpush2.msra.mxu0 0.0
    %67 = vmatprep.subr.mxu0 0.0
    %68 = vmatpush2.msra.mxu0 0.0
    %69 = vmatprep.subr.mxu0 0.0
    %70 = vmatpush2.msra.mxu0 0.0
    %71 = vmatprep.subr.mxu0 0.0
    %72 = vmatpush2.msra.mxu0 0.0
    %73 = vmatprep.subr.mxu0 0.0
    %74 = vmatpush2.msra.mxu0 0.0
    %75 = vmatprep.subr.mxu0 0.0
    %76 = vmatpush2.msra.mxu0 0.0
    %77 = vmatprep.subr.mxu0 0.0
    %78 = vmatpush2.msra.mxu0 0.0
    %79 = vmatprep.subr.mxu0 0.0
    %80 = vmatpush2.msra.mxu0 0.0
    %81 = vmatprep.subr.mxu0 0.0
    %82 = vmatpush2.msra.mxu0 0.0
    %83 = vmatprep.subr.mxu0 0.0
    %84 = vmatpush2.msra.mxu0 0.0
    %85 = vmatprep.subr.mxu0 0.0
    %86 = vmatpush2.msra.mxu0 0.0
    %87 = vmatprep.subr.mxu0 0.0
    %88 = vmatpush2.msra.mxu0 0.0
    %89 = vmatprep.subr.mxu0 0.0
    %90 = vmatpush2.msra.mxu0 0.0
    %91 = vmatprep.subr.mxu0 0.0
    %92 = vmatpush2.msra.mxu0 0.0
    %93 = vmatprep.subr.mxu0 0.0
    %94 = vmatpush2.msra.mxu0 0.0
    %95 = vmatprep.subr.mxu0 0.0
    %96 = vmatpush2.msra.mxu0 0.0
    %97 = vmatprep.mubr.f32.mxu0 0.0
    %98 = vmatmul.mubr.f32.gmra.mxu0 %v31
    %v99 = vpop.f32.mrf.mxu0
    %v100 = vadd.f32 0.0, %v99
    %v101 = vpop.f32.mrf.mxu0
    %102 = vdwg.mxu0
    %v103 = vld [vmem:[%s2] sm:$0xff]
    %v104 = vld [vmem:[%s2 + $0x8] sm:$0xff]
    %v105 = vld [vmem:[%s2 + $0x10] sm:$0xff]
    %v106 = vld [vmem:[%s2 + $0x18] sm:$0xff]
    %107 = vmatprep.subr.mxu0 0.0
    %108 = vmatpush1.msra.mxu0 0.0
    %109 = vmatprep.subr.mxu0 0.0
    %110 = vmatpush1.msra.mxu0 0.0
    %111 = vmatprep.subr.mxu0 0.0
    %112 = vmatpush1.msra.mxu0 0.0
    %113 = vmatprep.subr.mxu0 0.0
    %114 = vmatpush1.msra.mxu0 0.0
    %115 = vmatprep.subr.mxu0 0.0
    %116 = vmatpush1.msra.mxu0 0.0
    %117 = vmatprep.subr.mxu0 0.0
    %118 = vmatpush1.msra.mxu0 0.0
    %119 = vmatprep.subr.mxu0 0.0
    %120 = vmatpush1.msra.mxu0 0.0
    %121 = vmatprep.subr.mxu0 0.0
    %122 = vmatpush1.msra.mxu0 0.0
    %123 = vmatprep.subr.mxu0 0.0
    %124 = vmatpush1.msra.mxu0 0.0
    %125 = vmatprep.subr.mxu0 0.0
    %126 = vmatpush1.msra.mxu0 0.0
    %127 = vmatprep.subr.mxu0 0.0
    %128 = vmatpush1.msra.mxu0 0.0
    %129 = vmatprep.subr.mxu0 0.0
    %130 = vmatpush1.msra.mxu0 0.0
    %131 = vmatprep.subr.mxu0 0.0
    %132 = vmatpush1.msra.mxu0 %v106
    %133 = vmatprep.subr.mxu0 0.0
    %134 = vmatpush1.msra.mxu0 %v105
    %135 = vmatprep.subr.mxu0 0.0
    %136 = vmatpush1.msra.mxu0 %v104
    %137 = vmatprep.subr.mxu0 0.0
    %138 = vmatpush1.msra.mxu0 %v103
    %139 = vmatprep.subr.mxu0 0.0
    %140 = vmatpush2.msra.mxu0 0.0
    %141 = vmatprep.subr.mxu0 0.0
    %142 = vmatpush2.msra.mxu0 0.0
    %143 = vmatprep.subr.mxu0 0.0
    %144 = vmatpush2.msra.mxu0 0.0
    %145 = vmatprep.subr.mxu0 0.0
    %146 = vmatpush2.msra.mxu0 0.0
    %147 = vmatprep.subr.mxu0 0.0
    %148 = vmatpush2.msra.mxu0 0.0
    %149 = vmatprep.subr.mxu0 0.0
    %150 = vmatpush2.msra.mxu0 0.0
    %151 = vmatprep.subr.mxu0 0.0
    %152 = vmatpush2.msra.mxu0 0.0
    %153 = vmatprep.subr.mxu0 0.0
    %154 = vmatpush2.msra.mxu0 0.0
    %155 = vmatprep.subr.mxu0 0.0
    %156 = vmatpush2.msra.mxu0 0.0
    %157 = vmatprep.subr.mxu0 0.0
    %158 = vmatpush2.msra.mxu0 0.0
    %159 = vmatprep.subr.mxu0 0.0
    %160 = vmatpush2.msra.mxu0 0.0
    %161 = vmatprep.subr.mxu0 0.0
    %162 = vmatpush2.msra.mxu0 0.0
    %163 = vmatprep.subr.mxu0 0.0
    %164 = vmatpush2.msra.mxu0 0.0
    %165 = vmatprep.subr.mxu0 0.0
    %166 = vmatpush2.msra.mxu0 0.0
    %167 = vmatprep.subr.mxu0 0.0
    %168 = vmatpush2.msra.mxu0 0.0
    %169 = vmatprep.subr.mxu0 0.0
    %170 = vmatpush2.msra.mxu0 0.0
    %171 = vmatprep.mubr.f32.mxu0 0.0
    %172 = vmatmul.mubr.f32.gmra.mxu0 %v31
    %v173 = vpop.f32.mrf.mxu0
    %v174 = vadd.f32 0.0, %v173
    %v175 = vpop.f32.mrf.mxu0
    %176 = vdwg.mxu0
    %v177 = vxor.u32 %v174, 2147483648
    %v178 = vmul.f32 %v177, 1.442695
    %v179 = vpow.pop %v178
    %v180 = vadd.f32 %v179, 1.0
    %v181 = vrcp.pop %v180
    %v182 = vmul.f32 1.0, %v181
    %v183 = vmul.f32 %v174, %v182
    %v184 = vmul.f32 %v100, %v183
    %v185 = vld [vmem:[#allocation2] sm:$0xff]
    %v186 = vld [vmem:[%s3] sm:$0xff]
    %v187 = vld [vmem:[%s3 + $0x8] sm:$0xff]
    %v188 = vld [vmem:[%s3 + $0x10] sm:$0xff]
    %v189 = vld [vmem:[%s3 + $0x18] sm:$0xff]
    %v190 = vld [vmem:[%s3 + $0x20] sm:$0xff]
    %v191 = vld [vmem:[%s3 + $0x28] sm:$0xff]
    %v192 = vld [vmem:[%s3 + $0x30] sm:$0xff]
    %v193 = vld [vmem:[%s3 + $0x38] sm:$0xff]
    %v194 = vld [vmem:[%s3 + $0x40] sm:$0xff]
    %v195 = vld [vmem:[%s3 + $0x48] sm:$0xff]
    %v196 = vld [vmem:[%s3 + $0x50] sm:$0xff]
    %v197 = vld [vmem:[%s3 + $0x58] sm:$0xff]
    %v198 = vld [vmem:[%s3 + $0x60] sm:$0xff]
    %v199 = vld [vmem:[%s3 + $0x68] sm:$0xff]
    %v200 = vld [vmem:[%s3 + $0x70] sm:$0xff]
    %v201 = vld [vmem:[%s3 + $0x78] sm:$0xff]
    %202 = vmatprep.subr.mxu0 0.0
    %203 = vmatpush1.msra.mxu0 %v201
    %204 = vmatprep.subr.mxu0 0.0
    %205 = vmatpush1.msra.mxu0 %v200
    %206 = vmatprep.subr.mxu0 0.0
    %207 = vmatpush1.msra.mxu0 %v199
    %208 = vmatprep.subr.mxu0 0.0
    %209 = vmatpush1.msra.mxu0 %v198
    %210 = vmatprep.subr.mxu0 0.0
    %211 = vmatpush1.msra.mxu0 %v197
    %212 = vmatprep.subr.mxu0 0.0
    %213 = vmatpush1.msra.mxu0 %v196
    %214 = vmatprep.subr.mxu0 0.0
    %215 = vmatpush1.msra.mxu0 %v195
    %216 = vmatprep.subr.mxu0 0.0
    %217 = vmatpush1.msra.mxu0 %v194
    %218 = vmatprep.subr.mxu0 0.0
    %219 = vmatpush1.msra.mxu0 %v193
    %220 = vmatprep.subr.mxu0 0.0
    %221 = vmatpush1.msra.mxu0 %v192
    %222 = vmatprep.subr.mxu0 0.0
    %223 = vmatpush1.msra.mxu0 %v191
    %224 = vmatprep.subr.mxu0 0.0
    %225 = vmatpush1.msra.mxu0 %v190
    %226 = vmatprep.subr.mxu0 0.0
    %227 = vmatpush1.msra.mxu0 %v189
    %228 = vmatprep.subr.mxu0 0.0
    %229 = vmatpush1.msra.mxu0 %v188
    %230 = vmatprep.subr.mxu0 0.0
    %231 = vmatpush1.msra.mxu0 %v187
    %232 = vmatprep.subr.mxu0 0.0
    %233 = vmatpush1.msra.mxu0 %v186
    %234 = vmatprep.subr.mxu0 0.0
    %235 = vmatpush2.msra.mxu0 0.0
    %236 = vmatprep.subr.mxu0 0.0
    %237 = vmatpush2.msra.mxu0 0.0
    %238 = vmatprep.subr.mxu0 0.0
    %239 = vmatpush2.msra.mxu0 0.0
    %240 = vmatprep.subr.mxu0 0.0
    %241 = vmatpush2.msra.mxu0 0.0
    %242 = vmatprep.subr.mxu0 0.0
    %243 = vmatpush2.msra.mxu0 0.0
    %244 = vmatprep.subr.mxu0 0.0
    %245 = vmatpush2.msra.mxu0 0.0
    %246 = vmatprep.subr.mxu0 0.0
    %247 = vmatpush2.msra.mxu0 0.0
    %248 = vmatprep.subr.mxu0 0.0
    %249 = vmatpush2.msra.mxu0 0.0
    %250 = vmatprep.subr.mxu0 0.0
    %251 = vmatpush2.msra.mxu0 0.0
    %252 = vmatprep.subr.mxu0 0.0
    %253 = vmatpush2.msra.mxu0 0.0
    %254 = vmatprep.subr.mxu0 0.0
    %255 = vmatpush2.msra.mxu0 0.0
    %256 = vmatprep.subr.mxu0 0.0
    %257 = vmatpush2.msra.mxu0 0.0
    %258 = vmatprep.subr.mxu0 0.0
    %259 = vmatpush2.msra.mxu0 0.0
    %260 = vmatprep.subr.mxu0 0.0
    %261 = vmatpush2.msra.mxu0 0.0
    %262 = vmatprep.subr.mxu0 0.0
    %263 = vmatpush2.msra.mxu0 0.0
    %264 = vmatprep.subr.mxu0 0.0
    %265 = vmatpush2.msra.mxu0 0.0
    %266 = vmatprep.mubr.f32.mxu0 0.0
    %267 = vmatmul.mubr.f32.gmra.mxu0 %v184
    %v268 = vpop.f32.mrf.mxu0
    %v269 = vadd.f32 0.0, %v268
    %v270 = vpop.f32.mrf.mxu0
    %271 = vdwg.mxu0
    %v272 = vadd.f32 %v185, %v269
    %273 = vst.msk [vmem:[#allocation2] sm:$0xff] %vm29, %v272
    // Predicated region
    $region22: #{tpu_custom_call.1} parent=1 // pred_check
      %p274 = pneg %p18
    $region23: #{tpu_custom_call.1} parent=1 // pred_check_branch
      %276 = sbr.rel (%p274) target = $region25
    $region24: #{tpu_custom_call.1} parent=1 // pred_region
      %v277 = vld [vmem:[#allocation2] sm:$0xff]
      %278 = vst.msk [vmem:[#allocation3] sm:$0xff] %vm29, %v277
    $region25: #{tpu_custom_call.1} parent=1 // pred_fallthru
      _
    // Predicated region
    $region26: #{tpu_custom_call.1} parent=1 // pred_check
      _
    $region27: #{tpu_custom_call.1} parent=1 // pred_check_branch
      %280 = sbr.rel (0) target = $region29
    $region28: #{tpu_custom_call.1} parent=1 // pred_region
      %s282 = ssub.s32 128, 128
      %283 = vsyncadd [#allocation4], %s282
      %s285 = sshll.u32 [#allocation3], 4
      %s286 = int_to_ptr.vmem [resolvable:$true] %s285
      %288 = dma.vmem_to_hbm [thread:$0]  %s286, 128, %s4, [#allocation4]
    $region29: #{tpu_custom_call.1} parent=1 // pred_fallthru
      _
    // Predicated region
    $region30: #{tpu_custom_call.1} parent=1 // pred_check
      _
    $region31: #{tpu_custom_call.1} parent=1 // pred_check_branch
      %290 = sbr.rel (0) target = $region33
    $region32: #{tpu_custom_call.1} parent=1 // pred_region
      %291 = dma.done [#allocation4], 128
    $region33: #{tpu_custom_call.1} parent=1 // pred_fallthru
      _
    %292 = vsyncpa [#allocation4], 1

</llo_original>
